<compile_context>
chip_gen: v7x
topology: tpu7x:2x2x1
jax: 0.10.0
libtpu: 0.0.40
codegen_flags: <defaults>
</compile_context>

<pallas_src>
import jax
import jax.numpy as jnp
from jax.experimental import pallas as pl
from jax.experimental.pallas import tpu as pltpu

LANES = 128
SUBLANES = 8
TARGET_BLOCK_BYTES = 4 * 1024 * 1024   # per-input, per-step block (~4 MiB)


def _cdiv(a, b):
    return -(-a // b)


def _num_tensorcores():
    # v7x exposes 2 TensorCores per chip; v5e/v6e are single-TC.
    try:
        kind = jax.devices()[0].device_kind.lower()
    except Exception:
        return 1
    return 2 if ("v7" in kind or "7x" in kind) else 1


def mse_pallas(pred, real):
    assert pred.shape == real.shape, "pred and real must have the same shape"
    n = pred.size

    pred_flat = pred.reshape(-1)
    real_flat = real.reshape(-1)

    # Pad only to a lane (128) multiple.  Padding BOTH inputs with zeros adds
    # exactly zero to sum((real - pred)^2), so the pad region never needs masking.
    pad = (-n) % LANES
    if pad:
        pred_flat = jnp.pad(pred_flat, (0, pad))
        real_flat = jnp.pad(real_flat, (0, pad))
    rows = (n + pad) // LANES
    pred2d = pred_flat.reshape(rows, LANES)
    real2d = real_flat.reshape(rows, LANES)

    itemsize = jnp.dtype(pred2d.dtype).itemsize
    # Row count scaled by itemsize so the per-step bytes stay ~TARGET_BLOCK_BYTES
    # for bf16/int8 too; always a multiple of 32 rows (legal for packed dtypes).
    target_rows = max(32, (TARGET_BLOCK_BYTES // (LANES * itemsize)) // 32 * 32)
    block_rows = rows if rows <= target_rows else target_rows

    tiles_total = _cdiv(rows, block_rows)
    last_tile = tiles_total - 1
    ragged_rows = (rows % block_rows) != 0
    tail_rows = rows - last_tile * block_rows            # static Python int

    num_cores = min(_num_tensorcores(), tiles_total)
    tiles_per_core = _cdiv(tiles_total, num_cores)
    uneven_split = tiles_per_core * num_cores != tiles_total

    # Independent accumulation chains (hide VPU add latency on long blocks).
    chains = 1
    for c in (8, 4, 2):
        if block_rows % (SUBLANES * c) == 0:
            chains = c
            break
    grouped = (block_rows % SUBLANES) == 0

    if uneven_split:
        def in_map(c, i):
            return (jnp.minimum(c * tiles_per_core + i, last_tile), 0)
    else:
        def in_map(c, i):
            return (c * tiles_per_core + i, 0)

    def kernel(pred_ref, real_ref, out_ref, acc_ref):
        c = pl.program_id(0)
        i = pl.program_id(1)

        @pl.when(i == 0)
        def _():
            acc_ref[...] = jnp.zeros_like(acc_ref)

        t = c * tiles_per_core + i                       # virtual tile id

        def full_tile():
            d = real_ref[...].astype(jnp.float32) - pred_ref[...].astype(jnp.float32)
            d2 = d * d
            if grouped:
                # chains independent (8,128) accumulators; pure VPU adds.
                acc_ref[...] += d2.reshape(-1, chains, SUBLANES, LANES).sum(axis=0)
            else:
                # tiny single-block arrays whose row count is not a multiple of 8
                acc_ref[0:1, 0:1, :] = (
                    acc_ref[0:1, 0:1, :] + d2.sum(axis=0, keepdims=True)[None]
                )

        def tail_tile():
            d = real_ref[...].astype(jnp.float32) - pred_ref[...].astype(jnp.float32)
            d2 = (d * d)[:tail_rows]     # drop out-of-bounds (garbage) rows pre-reduce
            acc_ref[0:1, 0:1, :] = (
                acc_ref[0:1, 0:1, :] + d2.sum(axis=0, keepdims=True)[None]
            )

        if not ragged_rows and not uneven_split:
            full_tile()                                  # common case: no masking at all
        elif not ragged_rows:
            pl.when(t <= last_tile)(full_tile)           # skip clamped duplicate tiles
        else:
            pl.when(t < last_tile)(full_tile)            # cheap path for full tiles
            pl.when(t == last_tile)(tail_tile)           # only the tail tile pays

        @pl.when(i == tiles_per_core - 1)
        def _():
            out_ref[...] = acc_ref[...].reshape(1, chains, SUBLANES, LANES)

    block_bytes = block_rows * LANES * itemsize
    # 2 inputs x 2 pipeline buffers + headroom; capped so it is legal on every gen.
    vmem_limit = int(min(48 * 1024 * 1024,
                         max(32 * 1024 * 1024, 4 * block_bytes + (8 << 20))))

    lead_sem = getattr(pltpu, "CORE_PARALLEL", "parallel") if num_cores > 1 else "arbitrary"

    partials = pl.pallas_call(
        kernel,
        out_shape=jax.ShapeDtypeStruct((num_cores, chains, SUBLANES, LANES), jnp.float32),
        grid_spec=pltpu.PrefetchScalarGridSpec(
            num_scalar_prefetch=0,
            grid=(num_cores, tiles_per_core),
            in_specs=[
                pl.BlockSpec((block_rows, LANES), in_map),
                pl.BlockSpec((block_rows, LANES), in_map),
            ],
            out_specs=pl.BlockSpec((1, chains, SUBLANES, LANES),
                                   lambda c, i: (c, 0, 0, 0)),
            scratch_shapes=[pltpu.VMEM((chains, SUBLANES, LANES), jnp.float32)],
        ),
        compiler_params=pltpu.CompilerParams(
            dimension_semantics=(lead_sem, "arbitrary"),
            vmem_limit_bytes=vmem_limit,
        ),
    )(pred2d, real2d)

    # Final tiny reduction (num_cores x chains x 8 x 128) + divide by true numel.
    return (jnp.sum(partials) / n).astype(jnp.float32)


if __name__ == "__main__":
    key = jax.random.PRNGKey(0)
    k1, k2 = jax.random.split(key)
    pred = jax.random.normal(k1, (2, 4, 16, 16), dtype=jnp.float32)
    real = jax.random.normal(k2, (2, 4, 16, 16), dtype=jnp.float32)

    out = mse_pallas(pred, real)
    jax.block_until_ready(out)

    ref = jnp.mean((real - pred) ** 2)
    assert jnp.allclose(out, ref, rtol=1e-5, atol=1e-6), (out, ref)

    print("KERNEL_OK")
</pallas_src>

<mosaic_0001>
module attributes {stable_mosaic.version = 11 : i64} {
  func.func @kernel(%arg0: i32, %arg1: i32, %arg2: memref<16x128xf32, #tpu.memory_space<vmem>>, %arg3: memref<16x128xf32, #tpu.memory_space<vmem>>, %arg4: memref<1x2x8x128xf32, #tpu.memory_space<vmem>>, %arg5: memref<2x8x128xf32, #tpu.memory_space<vmem>>) attributes {dimension_semantics = [#tpu.dimension_semantics<arbitrary>, #tpu.dimension_semantics<arbitrary>], iteration_bounds = array<i64: 1, 1>, scalar_prefetch = 0 : i64, scratch_operands = 1 : i64, tpu.core_type = #tpu.core_type<tc>, window_params = [{transform_indices = @transform_0, window_bounds = array<i64: 16, 128>}, {transform_indices = @transform_1, window_bounds = array<i64: 16, 128>}, {transform_indices = @transform_2, window_bounds = array<i64: 1, 2, 8, 128>}]} {
    %c0_i32 = arith.constant 0 : i32
    %0 = arith.cmpi eq, %arg1, %c0_i32 : i32
    %1 = arith.extui %0 : i1 to i32
    %c0_i32_0 = arith.constant 0 : i32
    %2 = arith.cmpi ne, %1, %c0_i32_0 : i32
    scf.if %2 {
      %cst_12 = arith.constant 0.000000e+00 : f32
      %15 = vector.broadcast %cst_12 : f32 to vector<2x8x128xf32>
      %c0_13 = arith.constant 0 : index
      %c0_14 = arith.constant 0 : index
      %c0_15 = arith.constant 0 : index
      %16 = vector.load %arg5[%c0_13, %c0_14, %c0_15] : memref<2x8x128xf32, #tpu.memory_space<vmem>>, vector<2x8x128xf32>
      tpu.vector_store %arg5[%c0_13, %c0_14, %c0_15], %15 {strides = array<i32>} : memref<2x8x128xf32, #tpu.memory_space<vmem>>, vector<2x8x128xf32>,
    } else {
    }
    %c0 = arith.constant 0 : index
    %c0_1 = arith.constant 0 : index
    %3 = vector.load %arg3[%c0, %c0_1] : memref<16x128xf32, #tpu.memory_space<vmem>>, vector<16x128xf32>
    %c0_2 = arith.constant 0 : index
    %c0_3 = arith.constant 0 : index
    %4 = vector.load %arg2[%c0_2, %c0_3] : memref<16x128xf32, #tpu.memory_space<vmem>>, vector<16x128xf32>
    %5 = arith.subf %3, %4 : vector<16x128xf32>
    %6 = arith.mulf %5, %5 : vector<16x128xf32>
    %c0_4 = arith.constant 0 : index
    %c0_5 = arith.constant 0 : index
    %c0_6 = arith.constant 0 : index
    %7 = vector.load %arg5[%c0_4, %c0_5, %c0_6] : memref<2x8x128xf32, #tpu.memory_space<vmem>>, vector<2x8x128xf32>
    %8 = vector.shape_cast %6 : vector<16x128xf32> to vector<1x2x8x128xf32>
    %cst = arith.constant dense<0.000000e+00> : vector<2x8x128xf32>
    %9 = vector.multi_reduction <add>, %8, %cst [0] : vector<1x2x8x128xf32> to vector<2x8x128xf32>
    %10 = arith.addf %7, %9 : vector<2x8x128xf32>
    %c0_7 = arith.constant 0 : index
    %c0_8 = arith.constant 0 : index
    %c0_9 = arith.constant 0 : index
    %11 = vector.load %arg5[%c0_7, %c0_8, %c0_9] : memref<2x8x128xf32, #tpu.memory_space<vmem>>, vector<2x8x128xf32>
    tpu.vector_store %arg5[%c0_7, %c0_8, %c0_9], %10 {strides = array<i32>} : memref<2x8x128xf32, #tpu.memory_space<vmem>>, vector<2x8x128xf32>,
    %c0_i32_10 = arith.constant 0 : i32
    %12 = arith.cmpi eq, %arg1, %c0_i32_10 : i32
    %13 = arith.extui %12 : i1 to i32
    %c0_i32_11 = arith.constant 0 : i32
    %14 = arith.cmpi ne, %13, %c0_i32_11 : i32
    scf.if %14 {
      %c0_12 = arith.constant 0 : index
      %c0_13 = arith.constant 0 : index
      %c0_14 = arith.constant 0 : index
      %15 = vector.load %arg5[%c0_12, %c0_13, %c0_14] : memref<2x8x128xf32, #tpu.memory_space<vmem>>, vector<2x8x128xf32>
      %16 = vector.shape_cast %15 : vector<2x8x128xf32> to vector<1x2x8x128xf32>
      %c0_15 = arith.constant 0 : index
      %c0_16 = arith.constant 0 : index
      %c0_17 = arith.constant 0 : index
      %c0_18 = arith.constant 0 : index
      %17 = vector.load %arg4[%c0_15, %c0_16, %c0_17, %c0_18] : memref<1x2x8x128xf32, #tpu.memory_space<vmem>>, vector<1x2x8x128xf32>
      tpu.vector_store %arg4[%c0_15, %c0_16, %c0_17, %c0_18], %16 {strides = array<i32>} : memref<1x2x8x128xf32, #tpu.memory_space<vmem>>, vector<1x2x8x128xf32>,
    } else {
    }
    return
  }
  func.func @transform_0(%arg0: i32, %arg1: i32) -> (i32, i32) {
    %c1_i32 = arith.constant 1 : i32
    %0 = arith.muli %arg0, %c1_i32 : i32
    %1 = arith.addi %0, %arg1 : i32
    %c0_i32 = arith.constant 0 : i32
    %c0_i32_0 = arith.constant 0 : i32
    return %1, %c0_i32 : i32, i32
  }
  func.func @transform_1(%arg0: i32, %arg1: i32) -> (i32, i32) {
    %c1_i32 = arith.constant 1 : i32
    %0 = arith.muli %arg0, %c1_i32 : i32
    %1 = arith.addi %0, %arg1 : i32
    %c0_i32 = arith.constant 0 : i32
    %c0_i32_0 = arith.constant 0 : i32
    return %1, %c0_i32 : i32, i32
  }
  func.func @transform_2(%arg0: i32, %arg1: i32) -> (i32, i32, i32, i32) {
    %c0_i32 = arith.constant 0 : i32
    %c0_i32_0 = arith.constant 0 : i32
    %c0_i32_1 = arith.constant 0 : i32
    %c0_i32_2 = arith.constant 0 : i32
    return %arg0, %c0_i32, %c0_i32_0, %c0_i32_1 : i32, i32, i32, i32
  }
}

</mosaic_0001>

<llo_original>
// kernel: tpu_custom_call.1
$region0: #{tpu_custom_call.1}
  #allocation0 [shape = 'u32[]', space=smem, size = 0x4, offset = 0x4, fixed_abs, tag = 'smem constant byte address 0x4 - core index']
  #allocation1 [shape = 'u32[144,128]{1,0:T(1,128)}', space=vmem, size = 0x12000, scoped, tag = 'internal scratch']
  #allocation2 [shape = 'f32[2,8,128]{2,1,0:T(8,128)}', space=vmem, size = 0x2000, scoped, tag = 'scratch operand']
  %s0 = inlined_call_operand.hbm [shape: f32[16,128], index: 0, kind: input, shape index: {}]
  %s1 = inlined_call_operand.hbm [shape: f32[16,128], index: 1, kind: input, shape index: {}]
  %s2 = inlined_call_operand.hbm [shape: f32[1,2,8,128], index: 2, kind: output, shape index: {}]
  %s3 = sld [smem:[#allocation0]]
  $region34: #{tpu_custom_call.1} parent=0
    _
  %s5 = ssub.s32 1, %s3
  %s6 = scalar_select 0, %s5, %s3
  $region1: #{tpu_custom_call.1} parent=0
    #allocation3 [shape = 'u8[8192]{0}', space=vmem, size = 0x2000, scoped, tag = 'input window, operand 0, single buffered']
    #allocation4 [shape = 's32[1]{0}', space=sflag, size = 0x4, scoped, tag = 'scoped memory for tpu_custom_call.1']
    #allocation5 [shape = 's32[1]{0}', space=sflag, size = 0x4, scoped, tag = 'scoped memory for tpu_custom_call.1']
    #allocation6 [shape = 'u8[8192]{0}', space=vmem, size = 0x2000, scoped, tag = 'input window, operand 1, single buffered']
    #allocation7 [shape = 's32[1]{0}', space=sflag, size = 0x4, scoped, tag = 'scoped memory for tpu_custom_call.1']
    #allocation8 [shape = 'u8[8192]{0}', space=vmem, size = 0x2000, scoped, tag = 'output window, operand 0, single buffered']
    %7 = vsyncpa [#allocation4], 0
    %8 = vsyncpa [#allocation7], 0
    %9 = vsyncpa [#allocation5], 0
    // Predicated region
    $region2: #{tpu_custom_call.1} parent=1 // pred_check
      _
    $region3: #{tpu_custom_call.1} parent=1 // pred_check_branch
      %11 = sbr.rel (0) target = $region5
    $region4: #{tpu_custom_call.1} parent=1 // pred_region
      %s12 = sadd.s32 0, 0
      %s13 = smul.u32 2, %s12
      %s15 = ssub.s32 256, 256
      %16 = vsyncadd [#allocation4], %s15
      %s17 = smul.addr %s13, 128
      %s18 = scalar_lea.hbm %s0, %s17
      %s19 = sshll.u32 [#allocation3], 4
      %s20 = int_to_ptr.vmem [resolvable:$true] %s19
      %25 = dma.hbm_to_vmem [thread:$0]  %s18, 256, %s20, [#allocation4], 128, 128, 8
    $region5: #{tpu_custom_call.1} parent=1 // pred_fallthru
      _
    // Predicated region
    $region6: #{tpu_custom_call.1} parent=1 // pred_check
      _
    $region7: #{tpu_custom_call.1} parent=1 // pred_check_branch
      %27 = sbr.rel (0) target = $region9
    $region8: #{tpu_custom_call.1} parent=1 // pred_region
      %s28 = sadd.s32 0, 0
      %s29 = smul.u32 2, %s28
      %s31 = ssub.s32 256, 256
      %32 = vsyncadd [#allocation7], %s31
      %s33 = smul.addr %s29, 128
      %s34 = scalar_lea.hbm %s1, %s33
      %s35 = sshll.u32 [#allocation6], 4
      %s36 = int_to_ptr.vmem [resolvable:$true] %s35
      %41 = dma.hbm_to_vmem [thread:$0]  %s34, 256, %s36, [#allocation7], 128, 128, 8
    $region9: #{tpu_custom_call.1} parent=1 // pred_fallthru
      _
    // Predicated region
    $region10: #{tpu_custom_call.1} parent=1 // pred_check
      _
    $region11: #{tpu_custom_call.1} parent=1 // pred_check_branch
      %43 = sbr.rel (0) target = $region13
    $region12: #{tpu_custom_call.1} parent=1 // pred_region
      %44 = dma.done [#allocation4], 256
    $region13: #{tpu_custom_call.1} parent=1 // pred_fallthru
      _
    // Predicated region
    $region14: #{tpu_custom_call.1} parent=1 // pred_check
      _
    $region15: #{tpu_custom_call.1} parent=1 // pred_check_branch
      %46 = sbr.rel (0) target = $region17
    $region16: #{tpu_custom_call.1} parent=1 // pred_region
      %47 = dma.done [#allocation7], 256
    $region17: #{tpu_custom_call.1} parent=1 // pred_fallthru
      _
    %s48 = sadd.s32 0, 0
    %s49 = smul.u32 2, %s48
    %s50 = sadd.s32 0, 0
    %s51 = smul.u32 2, %s50
    %p52 = scmp.eq.s32.totalorder 0, 0
    // Predicated region
    $region18: #{tpu_custom_call.1} parent=1 // pred_check
      %p53 = pneg %p52
    $region19: #{tpu_custom_call.1} parent=1 // pred_check_branch
      %55 = sbr.rel (%p53) target = $region21
    $region20: #{tpu_custom_call.1} parent=1 // pred_region
      %56 = vst [vmem:[#allocation2] sm:$0xff] 0.0
      %57 = vst [vmem:[#allocation2 + $0x8] sm:$0xff] 0.0
    $region21: #{tpu_custom_call.1} parent=1 // pred_fallthru
      _
    %v58 = vld [vmem:[#allocation6] sm:$0xff]
    %v59 = vld [vmem:[#allocation6 + $0x8] sm:$0xff]
    %v60 = vld [vmem:[#allocation3] sm:$0xff]
    %v61 = vld [vmem:[#allocation3 + $0x8] sm:$0xff]
    %v62 = vsub.f32 %v58, %v60
    %v63 = vsub.f32 %v59, %v61
    %v64 = vmul.f32 %v62, %v62
    %v65 = vmul.f32 %v63, %v63
    %v66 = vld [vmem:[#allocation2] sm:$0xff]
    %v67 = vld [vmem:[#allocation2 + $0x8] sm:$0xff]
    %v68 = vadd.f32 %v64, 0.0
    %v69 = vadd.f32 %v65, 0.0
    %v70 = vadd.f32 %v66, %v68
    %v71 = vadd.f32 %v67, %v69
    %72 = vst [vmem:[#allocation2] sm:$0xff] %v70
    %73 = vst [vmem:[#allocation2 + $0x8] sm:$0xff] %v71
    // Predicated region
    $region22: #{tpu_custom_call.1} parent=1 // pred_check
      %p74 = pneg %p52
    $region23: #{tpu_custom_call.1} parent=1 // pred_check_branch
      %76 = sbr.rel (%p74) target = $region25
    $region24: #{tpu_custom_call.1} parent=1 // pred_region
      %v77 = vld [vmem:[#allocation2] sm:$0xff]
      %v78 = vld [vmem:[#allocation2 + $0x8] sm:$0xff]
      %79 = vst [vmem:[#allocation8] sm:$0xff] %v77
      %80 = vst [vmem:[#allocation8 + $0x8] sm:$0xff] %v78
    $region25: #{tpu_custom_call.1} parent=1 // pred_fallthru
      _
    // Predicated region
    $region26: #{tpu_custom_call.1} parent=1 // pred_check
      _
    $region27: #{tpu_custom_call.1} parent=1 // pred_check_branch
      %82 = sbr.rel (0) target = $region29
    $region28: #{tpu_custom_call.1} parent=1 // pred_region
      %s84 = ssub.s32 256, 256
      %85 = vsyncadd [#allocation5], %s84
      %s86 = sshll.u32 [#allocation8], 4
      %s87 = int_to_ptr.vmem [resolvable:$true] %s86
      %92 = dma.vmem_to_hbm [thread:$0]  %s87, 256, %s2, [#allocation5], 128, 128, 8
    $region29: #{tpu_custom_call.1} parent=1 // pred_fallthru
      _
    // Predicated region
    $region30: #{tpu_custom_call.1} parent=1 // pred_check
      _
    $region31: #{tpu_custom_call.1} parent=1 // pred_check_branch
      %94 = sbr.rel (0) target = $region33
    $region32: #{tpu_custom_call.1} parent=1 // pred_region
      %95 = dma.done [#allocation5], 256
    $region33: #{tpu_custom_call.1} parent=1 // pred_fallthru
      _
    %96 = vsyncpa [#allocation4], 1
    %97 = vsyncpa [#allocation7], 1
    %98 = vsyncpa [#allocation5], 1

</llo_original>
